<compile_context>
chip_gen: v7x
topology: tpu7x:2x2x1
jax: 0.10.0
libtpu: 0.0.40
codegen_flags: <defaults>
</compile_context>

<pallas_src>
import functools
from itertools import accumulate

import jax
import jax.numpy as jnp
from jax.experimental import pallas as pl
from jax.experimental.pallas import tpu as pltpu


# Conservative "keep the table VMEM-resident" budget. Pallas may double-buffer
# the block, so 16 MiB -> <=32 MiB VMEM, which fits v5e/v6e (128 MiB) and
# v7x (64 MiB physical) with headroom.
_RESIDENT_TABLE_BUDGET_BYTES = 16 * 1024 * 1024
_VMEM_LIMIT_BYTES = 32 * 1024 * 1024


def _resident_gather_kernel(idx_ref, w_ref, o_ref):
    # idx_ref: (B*F,) int32  SMEM  (scalar-prefetched, already offset-shifted)
    # w_ref:   (V, E) float32 VMEM (resident across the whole grid)
    # o_ref:   (1, 1, F*E) float32 VMEM output block for batch row b
    E = w_ref.shape[1]
    F = o_ref.shape[-1] // E
    b = pl.program_id(0)
    rows = []
    for f in range(F):  # F is static
        r = idx_ref[b * F + f]                    # scalar read from SMEM
        rows.append(w_ref[pl.ds(r, 1), :])        # (1, E) dynamic row slice
    # Single lane-packed store of the whole batch row.
    o_ref[...] = jnp.concatenate(rows, axis=-1).reshape(o_ref.shape)


def _hbm_row_gather_kernel(idx_ref, *refs):
    # idx_ref: (B*F,) int32 SMEM (only used by the index_maps)
    # refs[:-1]: F weight-row blocks, each (1, E), DMA'd from HBM by Pallas
    #            using the data-dependent index_maps.
    # refs[-1]:  (1, 1, F*E) output block.
    del idx_ref
    w_rows = refs[:-1]
    o_ref = refs[-1]
    o_ref[...] = jnp.concatenate([w[...] for w in w_rows], axis=-1).reshape(o_ref.shape)


@functools.partial(jax.jit, static_argnames=("force_hbm_gather",))
def field_embedding(x, weight, offsets, *, force_hbm_gather=False):
    """x: (B, F) int indices; weight: (V, E) float32; offsets: (F,) int.

    Returns (B, F, E) = weight[x + offsets].
    """
    B, F = x.shape
    V, E = weight.shape

    # Fold the per-field offset add out of the kernel (PyTorch: x + self.offset).
    # Cast to int32 (PyTorch uses int64 indices; int32 is what TPU addressing wants).
    # NOTE: like jnp.take, out-of-range indices are not checked in-kernel
    # (PyTorch nn.Embedding would raise).
    idx = (x.astype(jnp.int32) + offsets.astype(jnp.int32)[None, :]).reshape(B * F)

    out_shape = jax.ShapeDtypeStruct((B, 1, F * E), weight.dtype)
    out_spec = pl.BlockSpec((1, 1, F * E), lambda b, idx_ref: (b, 0, 0))
    compiler_params = pltpu.CompilerParams(
        dimension_semantics=("parallel",),
        vmem_limit_bytes=_VMEM_LIMIT_BYTES,
    )

    table_bytes = V * E * weight.dtype.itemsize
    use_resident = (not force_hbm_gather) and (table_bytes <= _RESIDENT_TABLE_BUDGET_BYTES)

    if use_resident:
        # Table is small: keep it VMEM-resident (constant index_map => fetched
        # from HBM exactly once) and gather rows in-kernel via dynamic slices.
        grid_spec = pltpu.PrefetchScalarGridSpec(
            num_scalar_prefetch=1,
            grid=(B,),
            in_specs=[pl.BlockSpec((V, E), lambda b, idx_ref: (0, 0))],
            out_specs=out_spec,
        )
        out = pl.pallas_call(
            _resident_gather_kernel,
            out_shape=out_shape,
            grid_spec=grid_spec,
            compiler_params=compiler_params,
        )(idx, weight)
    else:
        # Table too big for VMEM (e.g. on v7x): leave it in HBM and let Pallas
        # DMA exactly the F needed rows per batch element, with the row index
        # coming from the scalar-prefetched (SMEM) index array.
        def _row_spec(f):
            return pl.BlockSpec(
                (1, E), lambda b, idx_ref, f=f: (idx_ref[b * F + f], 0)
            )

        grid_spec = pltpu.PrefetchScalarGridSpec(
            num_scalar_prefetch=1,
            grid=(B,),
            in_specs=[_row_spec(f) for f in range(F)],
            out_specs=out_spec,
        )
        out = pl.pallas_call(
            _hbm_row_gather_kernel,
            out_shape=out_shape,
            grid_spec=grid_spec,
            compiler_params=compiler_params,
        )(idx, *([weight] * F))

    return out.reshape(B, F, E)


if __name__ == "__main__":
    # Module config (small, consistent with the forward pass)
    field_dims = [3, 4, 5, 6]          # F = 4 fields, V = sum = 18
    embedding_dim = 32                 # F * E = 128 -> lane-dense output slab
    batch = 2

    F = len(field_dims)
    V = sum(field_dims)
    E = embedding_dim

    key = jax.random.PRNGKey(0)
    kw, kx = jax.random.split(key)

    # Deterministic parameter init (nn.Embedding default: N(0, 1))
    weight = jax.random.normal(kw, (V, E), dtype=jnp.float32)

    # offset buffer: [0, *accumulate(field_dims)][:-1]
    offsets = jnp.asarray([0, *accumulate(field_dims)][:-1], dtype=jnp.int32)

    # x: per-field index in [0, field_dims[f])
    maxes = jnp.asarray(field_dims, dtype=jnp.int32)  # (F,)
    u = jax.random.uniform(kx, (batch, F))
    x = jnp.floor(u * maxes.astype(jnp.float32)).astype(jnp.int32)
    x = jnp.clip(x, 0, maxes - 1)

    # Reference (plain JAX gather)
    ref = jnp.take(weight, x + offsets[None, :], axis=0)

    # Path A: VMEM-resident table (auto-selected for this tiny table).
    out_resident = jax.block_until_ready(field_embedding(x, weight, offsets))
    assert out_resident.shape == (batch, F, E)
    assert out_resident.dtype == jnp.float32
    assert jnp.array_equal(out_resident, ref), "resident-table path mismatch"

    # Path B: HBM row-gather via data-dependent BlockSpec (v7x / huge-table path).
    out_hbm = jax.block_until_ready(
        field_embedding(x, weight, offsets, force_hbm_gather=True)
    )
    assert out_hbm.shape == (batch, F, E)
    assert jnp.array_equal(out_hbm, ref), "hbm row-gather path mismatch"

    print("KERNEL_OK")
</pallas_src>

<mosaic_0001>
module attributes {stable_mosaic.version = 11 : i64} {
  func.func @_resident_gather_kernel(%arg0: i32, %arg1: memref<8xi32, #tpu.memory_space<smem>>, %arg2: memref<18x32xf32, #tpu.memory_space<vmem>>, %arg3: memref<1x1x128xf32, #tpu.memory_space<vmem>>) attributes {dimension_semantics = [#tpu.dimension_semantics<parallel>], iteration_bounds = array<i64: 2>, scalar_prefetch = 1 : i64, scratch_operands = 0 : i64, tpu.core_type = #tpu.core_type<tc>, window_params = [{pipeline_mode = #tpu.pipeline_mode<synchronous>, transform_indices = @transform_0, window_bounds = array<i64: 18, 32>}, {transform_indices = @transform_1, window_bounds = array<i64: 1, 1, 128>}]} {
    %c4_i32 = arith.constant 4 : i32
    %0 = arith.muli %arg0, %c4_i32 : i32
    %c0_i32 = arith.constant 0 : i32
    %1 = arith.addi %0, %c0_i32 : i32
    %2 = arith.index_cast %1 : i32 to index
    %3 = memref.load %arg1[%2] : memref<8xi32, #tpu.memory_space<smem>>
    %4 = arith.index_cast %3 : i32 to index
    %c0 = arith.constant 0 : index
    %5 = vector.load %arg2[%4, %c0] : memref<18x32xf32, #tpu.memory_space<vmem>>, vector<1x32xf32>
    %c4_i32_0 = arith.constant 4 : i32
    %6 = arith.muli %arg0, %c4_i32_0 : i32
    %c1_i32 = arith.constant 1 : i32
    %7 = arith.addi %6, %c1_i32 : i32
    %8 = arith.index_cast %7 : i32 to index
    %9 = memref.load %arg1[%8] : memref<8xi32, #tpu.memory_space<smem>>
    %10 = arith.index_cast %9 : i32 to index
    %c0_1 = arith.constant 0 : index
    %11 = vector.load %arg2[%10, %c0_1] : memref<18x32xf32, #tpu.memory_space<vmem>>, vector<1x32xf32>
    %c4_i32_2 = arith.constant 4 : i32
    %12 = arith.muli %arg0, %c4_i32_2 : i32
    %c2_i32 = arith.constant 2 : i32
    %13 = arith.addi %12, %c2_i32 : i32
    %14 = arith.index_cast %13 : i32 to index
    %15 = memref.load %arg1[%14] : memref<8xi32, #tpu.memory_space<smem>>
    %16 = arith.index_cast %15 : i32 to index
    %c0_3 = arith.constant 0 : index
    %17 = vector.load %arg2[%16, %c0_3] : memref<18x32xf32, #tpu.memory_space<vmem>>, vector<1x32xf32>
    %c4_i32_4 = arith.constant 4 : i32
    %18 = arith.muli %arg0, %c4_i32_4 : i32
    %c3_i32 = arith.constant 3 : i32
    %19 = arith.addi %18, %c3_i32 : i32
    %20 = arith.index_cast %19 : i32 to index
    %21 = memref.load %arg1[%20] : memref<8xi32, #tpu.memory_space<smem>>
    %22 = arith.index_cast %21 : i32 to index
    %c0_5 = arith.constant 0 : index
    %23 = vector.load %arg2[%22, %c0_5] : memref<18x32xf32, #tpu.memory_space<vmem>>, vector<1x32xf32>
    %24 = tpu.concatenate %5, %11, %17, %23 in 1 : vector<1x32xf32>, vector<1x32xf32>, vector<1x32xf32>, vector<1x32xf32> -> vector<1x128xf32>
    %25 = vector.shape_cast %24 : vector<1x128xf32> to vector<1x1x128xf32>
    %c0_6 = arith.constant 0 : index
    %c0_7 = arith.constant 0 : index
    %c0_8 = arith.constant 0 : index
    %26 = vector.load %arg3[%c0_6, %c0_7, %c0_8] : memref<1x1x128xf32, #tpu.memory_space<vmem>>, vector<1x1x128xf32>
    tpu.vector_store %arg3[%c0_6, %c0_7, %c0_8], %25 {strides = array<i32>} : memref<1x1x128xf32, #tpu.memory_space<vmem>>, vector<1x1x128xf32>,
    return
  }
  func.func @transform_0(%arg0: i32, %arg1: memref<8xi32, #tpu.memory_space<smem>>) -> (i32, i32) {
    %c0_i32 = arith.constant 0 : i32
    %c0_i32_0 = arith.constant 0 : i32
    %c0_i32_1 = arith.constant 0 : i32
    return %c0_i32, %c0_i32_0 : i32, i32
  }
  func.func @transform_1(%arg0: i32, %arg1: memref<8xi32, #tpu.memory_space<smem>>) -> (i32, i32, i32) {
    %c0_i32 = arith.constant 0 : i32
    %c0_i32_0 = arith.constant 0 : i32
    %c0_i32_1 = arith.constant 0 : i32
    return %arg0, %c0_i32, %c0_i32_0 : i32, i32, i32
  }
}

</mosaic_0001>

<llo_original>
// kernel: field_embedding.1
$region0: #{field_embedding.1}
  #allocation0 [shape = 'u32[]', space=smem, size = 0x4, offset = 0x4, fixed_abs, tag = 'smem constant byte address 0x4 - core index']
  #allocation1 [shape = 'u32[144,128]{1,0:T(1,128)}', space=vmem, size = 0x12000, scoped, tag = 'internal scratch']
  #allocation2 [shape = 's32[1]{0}', space=sflag, size = 0x4, scoped, tag = 'scoped memory for field_embedding.1']
  #allocation3 [shape = 'u8[512]{0}', space=smem, size = 0x200, scoped, tag = 'prefetched SMEM operand 0']
  %s0 = inlined_call_operand.vmem [shape: s32[8], index: 0, kind: input, shape index: {}]
  %s1 = inlined_call_operand.hbm [shape: f32[18,32], index: 1, kind: input, shape index: {}]
  %s2 = inlined_call_operand.vmem [shape: f32[2,1,128], index: 2, kind: output, shape index: {}]
  %s3 = sld [smem:[#allocation0]]
  $region41: #{field_embedding.1} parent=0
    _
  %s5 = ssub.s32 1, %s3
  %s6 = scalar_select 0, %s5, %s3
  %s7 = sshll.u32 %s0, 4
  %s8 = int_to_ptr.vmem [resolvable:$true] %s7
  %10 = dma.vmem_to_smem %s8, 16, [#allocation3], [#allocation2]
  %11 = dma.done [#allocation2], 16
  %12 = sfence
  $region1: #{field_embedding.1} parent=0
    #allocation4 [shape = 'u8[12288]{0}', space=vmem, size = 0x3000, scoped, tag = 'input window, operand 1, single buffered']
    #allocation5 [shape = 's32[2]{0}', space=sflag, size = 0x8, scoped, tag = 'scoped memory for field_embedding.1']
    %13 = vsyncpa [#allocation5], 0
    loop: start=0, step=1, limit=4
    $region2: #{field_embedding.1} parent=1 // loop_pre_header
      _
    $region3: #{field_embedding.1} parent=1 // loop_header
      %s15 = sphi 0, %s19
      %p16 = scmp.ge.s32.totalorder %s15, 4
      %s23 = sphi 0, %s23
      %s25 = sphi 0, %s23
      %s26 = sphi 0, %s25
      %s40 = sphi 0, %s26
      %s46 = sphi 0, %s48
      %s49 = sphi 0, %s46
      %s50 = sphi 0, %s49
      %s66 = sphi 0, %s50
    $region4: #{field_embedding.1} parent=1 // loop_header_branch
      %18 = sbr.rel (%p16) target = $region8
    $region5: #{field_embedding.1} parent=1 // loop_body
      %s20 = ssub.s32 %s15, 1
      %s21 = ssub.s32 %s15, 2
      %s22 = sadd.s32 %s15, 1
      %s24 = sadd.s32 %s23, 1
      %p27 = scmp.eq.s32.totalorder %s15, 1
      %p28 = scmp.ne.s32.totalorder %s23, %s25
      %p29 = scmp.eq.s32.totalorder %s15, 0
      %p30 = por %p28, %p29
      %p31 = scmp.ne.s32.totalorder %s23, %s25
      %p32 = scmp.eq.s32.totalorder %s20, 1
      %p33 = por %p31, %p32
      %p34 = scmp.ne.s32.totalorder %s25, %s26
      %p35 = scmp.eq.s32.totalorder %s20, 0
      %p36 = por %p34, %p35
      %p37 = scmp.ne.s32.totalorder %s25, %s26
      %p38 = scmp.eq.s32.totalorder %s21, 1
      %p39 = por %p37, %p38
      %p41 = scmp.ne.s32.totalorder %s26, %s40
      %p42 = scmp.eq.s32.totalorder %s21, 0
      %p43 = por %p41, %p42
      %s44 = ssub.s32 %s15, %s22
      %p45 = scmp.eq.s32.totalorder %s44, 0
      %s47 = sadd.s32 %s46, 1
      %s48 = scalar_select %p45, %s46, %s47
      %p51 = pneg %p45
      %p52 = scmp.eq.s32.totalorder %s15, 1
      %p53 = por %p51, %p52
      %p54 = scmp.ne.s32.totalorder %s46, %s49
      %p55 = scmp.eq.s32.totalorder %s15, 0
      %p56 = por %p54, %p55
      %p57 = scmp.ne.s32.totalorder %s46, %s49
      %p58 = scmp.eq.s32.totalorder %s20, 1
      %p59 = por %p57, %p58
      %p60 = scmp.ne.s32.totalorder %s49, %s50
      %p61 = scmp.eq.s32.totalorder %s20, 0
      %p62 = por %p60, %p61
      %p63 = scmp.ne.s32.totalorder %s49, %s50
      %p64 = scmp.eq.s32.totalorder %s21, 1
      %p65 = por %p63, %p64
      %p67 = scmp.ne.s32.totalorder %s50, %s66
      %p68 = scmp.eq.s32.totalorder %s21, 0
      %p69 = por %p67, %p68
      %p70 = scmp.le.s32.totalorder 1, %s15
      %p71 = scmp.lt.s32.totalorder %s15, 3
      %p72 = pnand %p70, %p71
      %p73 = pneg %p72
      // Predicated region
      $region9: #{field_embedding.1} parent=5 // pred_check
        _
      $region10: #{field_embedding.1} parent=5 // pred_check_branch
        %75 = sbr.rel (%p72) target = $region12
      $region11: #{field_embedding.1} parent=5 // pred_region
        %s76 = ssub.s32 %s15, 1
        // Predicated region
        $region13: #{field_embedding.1} parent=11 // pred_check
          %p77 = pneg %p36
        $region14: #{field_embedding.1} parent=11 // pred_check_branch
          %79 = sbr.rel (%p77) target = $region16
        $region15: #{field_embedding.1} parent=11 // pred_region
          %s81 = ssub.s32 384, 384
          %82 = vsyncadd [#allocation5], %s81
          %s83 = sshll.u32 [#allocation4], 4
          %s84 = int_to_ptr.vmem [resolvable:$true] %s83
          %89 = dma.hbm_to_vmem [thread:$0]  %s1, 384, %s84, [#allocation5], 128, 128, 8
        $region16: #{field_embedding.1} parent=11 // pred_fallthru
          _
      $region12: #{field_embedding.1} parent=5 // pred_fallthru
        _
      %p90 = scmp.lt.s32.totalorder %s15, 2
      // Predicated region
      $region17: #{field_embedding.1} parent=5 // pred_check
        %p91 = pneg %p90
      $region18: #{field_embedding.1} parent=5 // pred_check_branch
        %93 = sbr.rel (%p91) target = $region20
      $region19: #{field_embedding.1} parent=5 // pred_region
        _
      $region20: #{field_embedding.1} parent=5 // pred_fallthru
        _
      %p94 = scmp.le.s32.totalorder 1, %s15
      %p95 = scmp.lt.s32.totalorder %s15, 3
      %p96 = pnand %p94, %p95
      %p97 = pneg %p96
      // Predicated region
      $region21: #{field_embedding.1} parent=5 // pred_check
        _
      $region22: #{field_embedding.1} parent=5 // pred_check_branch
        %99 = sbr.rel (%p96) target = $region24
      $region23: #{field_embedding.1} parent=5 // pred_region
        %s100 = ssub.s32 %s15, 1
        // Predicated region
        $region25: #{field_embedding.1} parent=23 // pred_check
          %p101 = pneg %p36
        $region26: #{field_embedding.1} parent=23 // pred_check_branch
          %103 = sbr.rel (%p101) target = $region28
        $region27: #{field_embedding.1} parent=23 // pred_region
          %104 = dma.done [#allocation5], 384
        $region28: #{field_embedding.1} parent=23 // pred_fallthru
          _
        %p105 = pneg %p36
        %p106 = pneg %p33
        %p107 = pneg %p62
        %p108 = pneg %p59
        %p109 = scmp.lt.s32.totalorder %s20, 1
        %s110 = scalar_select %p109, %s20, 1
        %s111 = scalar_lea.vmem %s2, %s110
        %p112 = scmp.lt.s32.totalorder %s20, 1
        %s113 = scalar_select %p112, %s20, 1
        %s114 = scalar_lea.vmem %s2, %s113
        %s115 = smul.u32 %s20, 4
        %s116 = sld [smem:[#allocation3 + %s115]]
        %s117 = scalar_lea.vmem [#allocation4], %s116
        %v118 = vld [vmem:[%s117] sm:$0x1]
        %s119 = sadd.s32 %s115, 1
        %s120 = sld [smem:[#allocation3 + %s119]]
        %s121 = scalar_lea.vmem [#allocation4], %s120
        %v122 = vld [vmem:[%s121] sm:$0x1]
        %s123 = sadd.s32 %s115, 2
        %s124 = sld [smem:[#allocation3 + %s123]]
        %s125 = scalar_lea.vmem [#allocation4], %s124
        %v126 = vld [vmem:[%s125] sm:$0x1]
        %s127 = sadd.s32 %s115, 3
        %s128 = sld [smem:[#allocation3 + %s127]]
        %s129 = scalar_lea.vmem [#allocation4], %s128
        %v130 = vld [vmem:[%s129] sm:$0x1]
        %132 = vrot.lane.b32.xlu0 %v122, 32
        %v133 = vpop.permute.xlu0 %132
        %136 = vrot.lane.b32.xlu0 %v126, 64
        %v137 = vpop.permute.xlu0 %136
        %140 = vrot.lane.b32.xlu0 %v130, 96
        %v141 = vpop.permute.xlu0 %140
        %vm143 = vcmask 261120
        %v144 = vsel %vm143, %v118, %v133
        %vm145 = vcmask 523264
        %v146 = vsel %vm145, %v144, %v137
        %vm147 = vcmask 785408
        %v148 = vsel %vm147, %v146, %v141
        %149 = vst [vmem:[%s114] sm:$0x1] %v148
        %p150 = scmp.lt.s32.totalorder %s20, 1
        %s151 = scalar_select %p150, %s20, 1
        %s152 = scalar_lea.vmem %s2, %s151
        // Predicated region
        $region29: #{field_embedding.1} parent=23 // pred_check
          %p153 = pneg %p59
        $region30: #{field_embedding.1} parent=23 // pred_check_branch
          %155 = sbr.rel (%p153) target = $region32
        $region31: #{field_embedding.1} parent=23 // pred_region
          _
        $region32: #{field_embedding.1} parent=23 // pred_fallthru
          _
      $region24: #{field_embedding.1} parent=5 // pred_fallthru
        _
      %p156 = scmp.le.s32.totalorder 2, %s15
      // Predicated region
      $region33: #{field_embedding.1} parent=5 // pred_check
        %p157 = pneg %p156
      $region34: #{field_embedding.1} parent=5 // pred_check_branch
        %159 = sbr.rel (%p157) target = $region36
      $region35: #{field_embedding.1} parent=5 // pred_region
        %s160 = ssub.s32 %s15, 2
        // Predicated region
        $region37: #{field_embedding.1} parent=35 // pred_check
          %p161 = pneg %p65
        $region38: #{field_embedding.1} parent=35 // pred_check_branch
          %163 = sbr.rel (%p161) target = $region40
        $region39: #{field_embedding.1} parent=35 // pred_region
          %p164 = scmp.lt.s32.totalorder %s21, 1
          %s165 = scalar_select %p164, %s21, 1
          %s166 = scalar_lea.vmem %s2, %s165
        $region40: #{field_embedding.1} parent=35 // pred_fallthru
          _
      $region36: #{field_embedding.1} parent=5 // pred_fallthru
        _
    $region6: #{field_embedding.1} parent=1 // loop_footer
      %s19 = sadd.s32 1, %s15
    $region7: #{field_embedding.1} parent=1 // loop_footer_branch
      %14 = sbr.rel target = $region3
    $region8: #{field_embedding.1} parent=1 // loop_exit
      _
    %167 = vsyncpa [#allocation5], 1
    %s168 = scalar_lea.sflag [#allocation5], 1
    %169 = vsyncpa %s168, 1

</llo_original>
